<compile_context>
chip_gen: v7x
topology: tpu7x:2x2x1
jax: 0.10.0
libtpu: 0.0.40
codegen_flags: <defaults>
</compile_context>

<pallas_src>
import functools

import jax
import jax.numpy as jnp
from jax.experimental import pallas as pl
from jax.experimental.pallas import tpu as pltpu


_DEFAULT_VMEM_CAP = 64 * 1024 * 1024  # conservative fallback: v7x per-core VMEM


def _vmem_capacity_bytes():
    try:
        cap = int(getattr(pltpu.get_tpu_info(), "vmem_capacity_bytes", 0))
        if cap > 0:
            return cap
    except Exception:
        pass
    return _DEFAULT_VMEM_CAP


def _choose_batch_tile(B, per_batch_bytes, budget_bytes, prefer_four_steps):
    """Largest divisor Bt of B whose working set fits the budget, preferring
    enough grid steps to keep the DMA pipeline (and, on v7x, both cores) busy."""
    max_bt = min(32, max(1, budget_bytes // per_batch_bytes))  # cap unroll depth
    divisors = [d for d in range(1, B + 1) if B % d == 0 and d <= max_bt]
    if not divisors:
        return 1
    preds = []
    if prefer_four_steps:
        # v7x: >= 4 and even grid steps -> >= 2 pipelined steps per TensorCore.
        preds.append(lambda d: B // d >= 4 and (B // d) % 2 == 0)
    preds.append(lambda d: B // d >= 2)
    preds.append(lambda d: True)
    for pred in preds:
        cands = [d for d in divisors if pred(d)]
        if cands:
            return max(cands)
    return 1


# ---------------------------------------------------------------------------
# Fused single-pass kernel: pool -> fc -> sigmoid -> scale for one batch block.
# ---------------------------------------------------------------------------
def _fused_kernel(x_ref, w1t_ref, w2t_ref, o_ref, *, inv_hw):
    # x_ref  : (Bt, C, HW)  input block (native dtype)
    # w1t_ref: (hid, C) f32 == fc1.weight   (resident across grid steps)
    # w2t_ref: (C, hid) f32 == fc2.weight   (resident across grid steps)
    # o_ref  : (Bt, C, HW)
    bt = x_ref.shape[0]
    hw = x_ref.shape[2]
    w1t = w1t_ref[...]
    w2t = w2t_ref[...]
    ones = jnp.ones((hw, 1), x_ref.dtype)          # MXU pooling vector

    for i in range(bt):                            # Bt is small & static: unroll
        x = x_ref[i]                               # (C, HW)
        # Global average pool on the (otherwise idle) MXU, f32 accumulation.
        pooled = jnp.dot(x, ones, preferred_element_type=jnp.float32) * inv_hw  # (C, 1)
        # fc: Linear -> ReLU -> Linear -> Sigmoid, kept in column layout so the
        # gate lands directly in (C, 1) for the lane-broadcast multiply.
        h = jnp.maximum(
            jnp.dot(w1t, pooled, preferred_element_type=jnp.float32), 0.0)      # (hid, 1)
        g = jax.nn.sigmoid(
            jnp.dot(w2t, h, preferred_element_type=jnp.float32))                # (C, 1)
        # Broadcast multiply in the input dtype (no full-tile f32 upcast).
        o_ref[i] = (x * g.astype(x.dtype)).astype(o_ref.dtype)


# ---------------------------------------------------------------------------
# Two-pass fallback for slabs that don't fit VMEM (e.g. C=64, 224x224 on v7x).
# ---------------------------------------------------------------------------
def _pool_fc_kernel(x_ref, w1t_ref, w2t_ref, scale_ref, acc_ref, *, inv_hw, hw, hwt):
    # grid = (B, HW tiles); x_ref: (1, C, hwt); scale_ref: (1, C, 1) f32 output.
    s = pl.program_id(1)

    @pl.when(s == 0)
    def _():
        acc_ref[...] = jnp.zeros_like(acc_ref)

    x = x_ref[0]                                               # (C, hwt)
    # Mask lanes past the true spatial extent (the partial last tile reads
    # unspecified memory).
    lane = jax.lax.broadcasted_iota(jnp.int32, x.shape, 1)
    x = jnp.where(lane + s * hwt < hw, x, jnp.zeros_like(x))
    ones = jnp.ones((hwt, 1), x.dtype)
    acc_ref[...] += jnp.dot(x, ones, preferred_element_type=jnp.float32)  # (C, 1)

    @pl.when(s == pl.num_programs(1) - 1)
    def _():
        pooled = acc_ref[...] * inv_hw                         # (C, 1) exact mean
        h = jnp.maximum(
            jnp.dot(w1t_ref[...], pooled, preferred_element_type=jnp.float32), 0.0)
        g = jax.nn.sigmoid(
            jnp.dot(w2t_ref[...], h, preferred_element_type=jnp.float32))       # (C, 1)
        scale_ref[...] = g[None]                               # (1, C, 1)


def _scale_kernel(x_ref, scale_ref, o_ref):
    # grid = (B, HW tiles); pure streaming broadcast multiply (HBM bound).
    x = x_ref[...]                                             # (1, C, hwt)
    g = scale_ref[...].astype(x.dtype)                         # (1, C, 1)
    o_ref[...] = (x * g).astype(o_ref.dtype)


# ---------------------------------------------------------------------------
# Wrapper
# ---------------------------------------------------------------------------
def channel_attention(x, w1, w2, *, vmem_budget_bytes=None):
    """out = x * sigmoid(relu(gap(x) @ w1) @ w2)[:, :, None, None].

    x:  (B, C, H, W)
    w1: (C, C//ratio)   == PyTorch fc[0].weight.T
    w2: (C//ratio, C)   == PyTorch fc[2].weight.T
    vmem_budget_bytes: optional tiling-budget override (testing only).
    """
    B, C, H, W = x.shape
    HW = H * W
    hid = w1.shape[1]
    itemsize = jnp.dtype(x.dtype).itemsize
    inv_hw = 1.0 / HW

    vmem_cap = _vmem_capacity_bytes()
    vmem_limit = int(vmem_cap * 0.75)              # 48 MiB on v7x, 96 MiB on v5e/v6e
    budget = int(vmem_cap * 0.6) if vmem_budget_bytes is None else int(vmem_budget_bytes)
    v7x_like = vmem_cap <= 64 * 1024 * 1024        # 2 TensorCores, small VMEM

    x_flat = x.reshape(B, C, HW)                   # contiguous reshape -> free
    # Hoist weight transpose + f32 upcast out of the kernel (resident blocks).
    w1t = w1.T.astype(jnp.float32)                 # (hid, C) == fc1.weight
    w2t = w2.T.astype(jnp.float32)                 # (C, hid) == fc2.weight
    w_bytes = (w1t.size + w2t.size) * 4

    # Per-batch-element working set: double-buffered input + output blocks
    # plus in-kernel live values -> 6x slab is a safe sizing factor.
    per_batch_bytes = 6 * C * HW * itemsize

    if per_batch_bytes <= budget or HW <= 128:
        # ------------------- fused single-pass path -------------------
        Bt = _choose_batch_tile(B, per_batch_bytes, budget, prefer_four_steps=v7x_like)
        cost = pl.CostEstimate(
            flops=3 * B * C * HW + 4 * B * C * hid,     # pool + scale + 2 matmuls
            transcendentals=B * C,                      # sigmoid
            bytes_accessed=2 * B * C * HW * itemsize + w_bytes,
        )
        out_flat = pl.pallas_call(
            functools.partial(_fused_kernel, inv_hw=inv_hw),
            out_shape=jax.ShapeDtypeStruct((B, C, HW), x.dtype),
            grid_spec=pltpu.PrefetchScalarGridSpec(
                num_scalar_prefetch=0,
                grid=(B // Bt,),
                in_specs=[
                    pl.BlockSpec((Bt, C, HW), lambda b: (b, 0, 0)),
                    pl.BlockSpec((hid, C), lambda b: (0, 0)),
                    pl.BlockSpec((C, hid), lambda b: (0, 0)),
                ],
                out_specs=pl.BlockSpec((Bt, C, HW), lambda b: (b, 0, 0)),
            ),
            compiler_params=pltpu.CompilerParams(
                dimension_semantics=("parallel",),
                vmem_limit_bytes=vmem_limit,
            ),
            cost_estimate=cost,
        )(x_flat, w1t, w2t)
        return out_flat.reshape(B, C, H, W)

    # --------- two-pass fallback: slabs that don't fit VMEM ---------
    # Pass 1: pool (+ fc + sigmoid) over an HW-reduction grid -> (B, C, 1) f32.
    # Pass 2: streaming broadcast multiply over (batch, HW tiles).
    hwt = max(128, (budget // (6 * C * itemsize)) // 128 * 128)
    hwt = min(hwt, ((HW + 127) // 128) * 128)
    n_s = pl.cdiv(HW, hwt)

    scale = pl.pallas_call(
        functools.partial(_pool_fc_kernel, inv_hw=inv_hw, hw=HW, hwt=hwt),
        out_shape=jax.ShapeDtypeStruct((B, C, 1), jnp.float32),
        grid_spec=pltpu.PrefetchScalarGridSpec(
            num_scalar_prefetch=0,
            grid=(B, n_s),
            in_specs=[
                pl.BlockSpec((1, C, hwt), lambda b, s: (b, 0, s)),
                pl.BlockSpec((hid, C), lambda b, s: (0, 0)),
                pl.BlockSpec((C, hid), lambda b, s: (0, 0)),
            ],
            out_specs=pl.BlockSpec((1, C, 1), lambda b, s: (b, 0, 0)),
            scratch_shapes=[pltpu.VMEM((C, 1), jnp.float32)],
        ),
        compiler_params=pltpu.CompilerParams(
            dimension_semantics=("parallel", "arbitrary"),
            vmem_limit_bytes=vmem_limit,
        ),
        cost_estimate=pl.CostEstimate(
            flops=2 * B * C * HW + 4 * B * C * hid,
            transcendentals=B * C,
            bytes_accessed=B * C * HW * itemsize + B * C * 4 + w_bytes,
        ),
    )(x_flat, w1t, w2t)

    out_flat = pl.pallas_call(
        _scale_kernel,
        out_shape=jax.ShapeDtypeStruct((B, C, HW), x.dtype),
        grid_spec=pltpu.PrefetchScalarGridSpec(
            num_scalar_prefetch=0,
            grid=(B, n_s),
            in_specs=[
                pl.BlockSpec((1, C, hwt), lambda b, s: (b, 0, s)),
                pl.BlockSpec((1, C, 1), lambda b, s: (b, 0, 0)),
            ],
            out_specs=pl.BlockSpec((1, C, hwt), lambda b, s: (b, 0, s)),
        ),
        compiler_params=pltpu.CompilerParams(
            dimension_semantics=("parallel", "parallel"),
            vmem_limit_bytes=vmem_limit,
        ),
        cost_estimate=pl.CostEstimate(
            flops=B * C * HW,
            transcendentals=0,
            bytes_accessed=2 * B * C * HW * itemsize + B * C * 4,
        ),
    )(x_flat, scale)
    return out_flat.reshape(B, C, H, W)


def channel_attention_ref(x, w1, w2):
    """Pure-JAX reference mirroring the PyTorch forward."""
    y = jnp.mean(x, axis=(2, 3))                    # (B, C)
    h = jnp.maximum(y @ w1, 0.0)                    # (B, C//r)
    s = jax.nn.sigmoid(h @ w2)                      # (B, C)
    return x * s[:, :, None, None]


if __name__ == "__main__":
    key = jax.random.PRNGKey(0)
    kx, k1, k2, kx2 = jax.random.split(key, 4)

    # ratio=16 requires C >= 16; keep shapes small.
    B, C, H, W = 2, 64, 16, 16
    ratio = 16
    hid = C // ratio

    x = jax.random.normal(kx, (B, C, H, W), dtype=jnp.float32)
    # PyTorch Linear weight is (out, in); we take the transposed (in, out).
    w1 = jax.random.normal(k1, (C, hid), dtype=jnp.float32) * 0.1
    w2 = jax.random.normal(k2, (hid, C), dtype=jnp.float32) * 0.1

    out = jax.block_until_ready(channel_attention(x, w1, w2))
    ref = channel_attention_ref(x, w1, w2)
    assert out.shape == (B, C, H, W)
    assert jnp.allclose(out, ref, atol=1e-5, rtol=1e-5), "mismatch vs reference"

    # Non-128-multiple HW (14*14 = 196): exercises the unpadded masked-tail path.
    x2 = jax.random.normal(kx2, (B, C, 14, 14), dtype=jnp.float32)
    out2 = jax.block_until_ready(channel_attention(x2, w1, w2))
    ref2 = channel_attention_ref(x2, w1, w2)
    assert jnp.allclose(out2, ref2, atol=1e-5, rtol=1e-5), "mismatch (odd HW)"

    # Force the two-pass (pool + scale) fallback with a tiny tiling budget so
    # the large-spatial path (incl. HW-tile masking) is compiled and checked.
    out3 = jax.block_until_ready(
        channel_attention(x2, w1, w2, vmem_budget_bytes=128 * 1024))
    assert jnp.allclose(out3, ref2, atol=1e-5, rtol=1e-5), "mismatch (two-pass)"

    print("KERNEL_OK")
</pallas_src>

<mosaic_0001>
module attributes {stable_mosaic.version = 11 : i64} {
  func.func @_fused_kernel(%arg0: i32, %arg1: memref<1x64x256xf32, #tpu.memory_space<vmem>>, %arg2: memref<4x64xf32, #tpu.memory_space<vmem>>, %arg3: memref<64x4xf32, #tpu.memory_space<vmem>>, %arg4: memref<1x64x256xf32, #tpu.memory_space<vmem>>) attributes {dimension_semantics = [#tpu.dimension_semantics<parallel>], iteration_bounds = array<i64: 2>, scalar_prefetch = 0 : i64, scratch_operands = 0 : i64, tpu.core_type = #tpu.core_type<tc>, window_params = [{transform_indices = @transform_0, window_bounds = array<i64: 1, 64, 256>}, {pipeline_mode = #tpu.pipeline_mode<synchronous>, transform_indices = @transform_1, window_bounds = array<i64: 4, 64>}, {pipeline_mode = #tpu.pipeline_mode<synchronous>, transform_indices = @transform_2, window_bounds = array<i64: 64, 4>}, {transform_indices = @transform_3, window_bounds = array<i64: 1, 64, 256>}]} {
    %c0 = arith.constant 0 : index
    %c0_0 = arith.constant 0 : index
    %0 = vector.load %arg2[%c0, %c0_0] : memref<4x64xf32, #tpu.memory_space<vmem>>, vector<4x64xf32>
    %c0_1 = arith.constant 0 : index
    %c0_2 = arith.constant 0 : index
    %1 = vector.load %arg3[%c0_1, %c0_2] : memref<64x4xf32, #tpu.memory_space<vmem>>, vector<64x4xf32>
    %cst = arith.constant 1.000000e+00 : f32
    %2 = vector.broadcast %cst : f32 to vector<256x1xf32>
    %c0_3 = arith.constant 0 : index
    %c0_4 = arith.constant 0 : index
    %c0_5 = arith.constant 0 : index
    %3 = vector.load %arg1[%c0_3, %c0_4, %c0_5] : memref<1x64x256xf32, #tpu.memory_space<vmem>>, vector<1x64x256xf32>
    %4 = vector.shape_cast %3 : vector<1x64x256xf32> to vector<64x256xf32>
    %cst_6 = arith.constant dense<0.000000e+00> : vector<64x1xf32>
    %5 = tpu.matmul %4, %2, %cst_6 {dimension_numbers = #tpu.dot_dimension_numbers<[1], [0], [0], [1], [0, 0, 1, 1], [], []>} : vector<64x256xf32>, vector<256x1xf32>, vector<64x1xf32> -> vector<64x1xf32>
    %cst_7 = arith.constant 3.906250e-03 : f32
    %6 = vector.broadcast %cst_7 : f32 to vector<64x1xf32>
    %7 = arith.mulf %5, %6 : vector<64x1xf32>
    %cst_8 = arith.constant dense<0.000000e+00> : vector<4x1xf32>
    %8 = tpu.matmul %0, %7, %cst_8 {dimension_numbers = #tpu.dot_dimension_numbers<[1], [0], [0], [1], [0, 0, 1, 1], [], []>} : vector<4x64xf32>, vector<64x1xf32>, vector<4x1xf32> -> vector<4x1xf32>
    %cst_9 = arith.constant 0.000000e+00 : f32
    %9 = vector.broadcast %cst_9 : f32 to vector<4x1xf32>
    %10 = arith.maximumf %8, %9 : vector<4x1xf32>
    %cst_10 = arith.constant dense<0.000000e+00> : vector<64x1xf32>
    %11 = tpu.matmul %1, %10, %cst_10 {dimension_numbers = #tpu.dot_dimension_numbers<[1], [0], [0], [1], [0, 0, 1, 1], [], []>} : vector<64x4xf32>, vector<4x1xf32>, vector<64x1xf32> -> vector<64x1xf32>
    %12 = arith.negf %11 : vector<64x1xf32>
    %13 = math.exp %12 : vector<64x1xf32>
    %cst_11 = arith.constant 1.000000e+00 : f32
    %14 = vector.broadcast %cst_11 : f32 to vector<64x1xf32>
    %15 = arith.addf %14, %13 : vector<64x1xf32>
    %16 = arith.divf %14, %15 : vector<64x1xf32>
    %17 = vector.broadcast %16 : vector<64x1xf32> to vector<64x256xf32>
    %18 = arith.mulf %4, %17 : vector<64x256xf32>
    %c0_12 = arith.constant 0 : index
    %c0_13 = arith.constant 0 : index
    %c0_14 = arith.constant 0 : index
    %19 = vector.load %arg4[%c0_12, %c0_13, %c0_14] : memref<1x64x256xf32, #tpu.memory_space<vmem>>, vector<1x64x256xf32>
    %20 = vector.shape_cast %19 : vector<1x64x256xf32> to vector<64x256xf32>
    %21 = vector.shape_cast %18 : vector<64x256xf32> to vector<1x64x256xf32>
    tpu.vector_store %arg4[%c0_12, %c0_13, %c0_14], %21 {strides = array<i32>} : memref<1x64x256xf32, #tpu.memory_space<vmem>>, vector<1x64x256xf32>,
    return
  }
  func.func @transform_0(%arg0: i32) -> (i32, i32, i32) {
    %c0_i32 = arith.constant 0 : i32
    %c0_i32_0 = arith.constant 0 : i32
    %c0_i32_1 = arith.constant 0 : i32
    return %arg0, %c0_i32, %c0_i32_0 : i32, i32, i32
  }
  func.func @transform_1(%arg0: i32) -> (i32, i32) {
    %c0_i32 = arith.constant 0 : i32
    %c0_i32_0 = arith.constant 0 : i32
    %c0_i32_1 = arith.constant 0 : i32
    return %c0_i32, %c0_i32_0 : i32, i32
  }
  func.func @transform_2(%arg0: i32) -> (i32, i32) {
    %c0_i32 = arith.constant 0 : i32
    %c0_i32_0 = arith.constant 0 : i32
    %c0_i32_1 = arith.constant 0 : i32
    return %c0_i32, %c0_i32_0 : i32, i32
  }
  func.func @transform_3(%arg0: i32) -> (i32, i32, i32) {
    %c0_i32 = arith.constant 0 : i32
    %c0_i32_0 = arith.constant 0 : i32
    %c0_i32_1 = arith.constant 0 : i32
    return %arg0, %c0_i32, %c0_i32_0 : i32, i32, i32
  }
}

</mosaic_0001>

<llo_original>
// kernel: tpu_custom_call.1
$region0: #{tpu_custom_call.1}
  #allocation0 [shape = 'u32[]', space=smem, size = 0x4, offset = 0x4, fixed_abs, tag = 'smem constant byte address 0x4 - core index']
  #allocation1 [shape = 'u32[144,128]{1,0:T(1,128)}', space=vmem, size = 0x12000, scoped, tag = 'internal scratch']
  %s0 = inlined_call_operand.hbm [shape: f32[2,64,256], index: 0, kind: input, shape index: {}]
  %s1 = inlined_call_operand.vmem [shape: f32[4,64], index: 1, kind: input, shape index: {}]
  %s2 = inlined_call_operand.vmem [shape: f32[64,4], index: 2, kind: input, shape index: {}]
  %s3 = inlined_call_operand.hbm [shape: f32[2,64,256], index: 3, kind: output, shape index: {}]
  %s4 = sld [smem:[#allocation0]]
  $region49: #{tpu_custom_call.1} parent=0
    _
  %s6 = ssub.s32 1, %s4
  %s7 = scalar_select 0, %s6, %s4
  $region1: #{tpu_custom_call.1} parent=0
    #allocation2 [shape = 'u8[131072]{0}', space=vmem, size = 0x20000, scoped, tag = 'input window, operand 0']
    #allocation3 [shape = 's32[2]{0}', space=sflag, size = 0x8, scoped, tag = 'scoped memory for tpu_custom_call.1']
    #allocation4 [shape = 's32[2]{0}', space=sflag, size = 0x8, scoped, tag = 'scoped memory for tpu_custom_call.1']
    #allocation5 [shape = 'u8[131072]{0}', space=vmem, size = 0x20000, scoped, tag = 'output window, operand 0']
    %8 = vsyncpa [#allocation3], 0
    %s9 = scalar_lea.sflag [#allocation3], 1
    %10 = vsyncpa %s9, 0
    %11 = vsyncpa [#allocation4], 0
    %s12 = scalar_lea.sflag [#allocation4], 1
    %13 = vsyncpa %s12, 0
    loop: start=0, step=1, limit=4
    $region2: #{tpu_custom_call.1} parent=1 // loop_pre_header
      _
    $region3: #{tpu_custom_call.1} parent=1 // loop_header
      %s15 = sphi 0, %s19
      %p16 = scmp.ge.s32.totalorder %s15, 4
      %s25 = sphi 0, %s27
      %s28 = sphi 0, %s25
      %s29 = sphi 0, %s28
      %s45 = sphi 0, %s29
      %s49 = sphi 0, %s49
      %s51 = sphi 0, %s49
      %s52 = sphi 0, %s51
      %s66 = sphi 0, %s52
      %s70 = sphi 0, %s70
      %s72 = sphi 0, %s70
      %s73 = sphi 0, %s72
      %s87 = sphi 0, %s73
      %s93 = sphi 0, %s95
      %s96 = sphi 0, %s93
      %s97 = sphi 0, %s96
      %s113 = sphi 0, %s97
    $region4: #{tpu_custom_call.1} parent=1 // loop_header_branch
      %18 = sbr.rel (%p16) target = $region8
    $region5: #{tpu_custom_call.1} parent=1 // loop_body
      %s20 = ssub.s32 %s15, 1
      %s21 = ssub.s32 %s15, 2
      %s22 = sadd.s32 %s15, 1
      %s23 = ssub.s32 %s15, %s22
      %p24 = scmp.eq.s32.totalorder %s23, 0
      %s26 = sadd.s32 %s25, 1
      %s27 = scalar_select %p24, %s25, %s26
      %p30 = pneg %p24
      %p31 = scmp.eq.s32.totalorder %s15, 1
      %p32 = por %p30, %p31
      %p33 = scmp.ne.s32.totalorder %s25, %s28
      %p34 = scmp.eq.s32.totalorder %s15, 0
      %p35 = por %p33, %p34
      %p36 = scmp.ne.s32.totalorder %s25, %s28
      %p37 = scmp.eq.s32.totalorder %s20, 1
      %p38 = por %p36, %p37
      %p39 = scmp.ne.s32.totalorder %s28, %s29
      %p40 = scmp.eq.s32.totalorder %s20, 0
      %p41 = por %p39, %p40
      %p42 = scmp.ne.s32.totalorder %s28, %s29
      %p43 = scmp.eq.s32.totalorder %s21, 1
      %p44 = por %p42, %p43
      %p46 = scmp.ne.s32.totalorder %s29, %s45
      %p47 = scmp.eq.s32.totalorder %s21, 0
      %p48 = por %p46, %p47
      %s50 = sadd.s32 %s49, 1
      %p53 = scmp.eq.s32.totalorder %s15, 1
      %p54 = scmp.ne.s32.totalorder %s49, %s51
      %p55 = scmp.eq.s32.totalorder %s15, 0
      %p56 = por %p54, %p55
      %p57 = scmp.ne.s32.totalorder %s49, %s51
      %p58 = scmp.eq.s32.totalorder %s20, 1
      %p59 = por %p57, %p58
      %p60 = scmp.ne.s32.totalorder %s51, %s52
      %p61 = scmp.eq.s32.totalorder %s20, 0
      %p62 = por %p60, %p61
      %p63 = scmp.ne.s32.totalorder %s51, %s52
      %p64 = scmp.eq.s32.totalorder %s21, 1
      %p65 = por %p63, %p64
      %p67 = scmp.ne.s32.totalorder %s52, %s66
      %p68 = scmp.eq.s32.totalorder %s21, 0
      %p69 = por %p67, %p68
      %s71 = sadd.s32 %s70, 1
      %p74 = scmp.eq.s32.totalorder %s15, 1
      %p75 = scmp.ne.s32.totalorder %s70, %s72
      %p76 = scmp.eq.s32.totalorder %s15, 0
      %p77 = por %p75, %p76
      %p78 = scmp.ne.s32.totalorder %s70, %s72
      %p79 = scmp.eq.s32.totalorder %s20, 1
      %p80 = por %p78, %p79
      %p81 = scmp.ne.s32.totalorder %s72, %s73
      %p82 = scmp.eq.s32.totalorder %s20, 0
      %p83 = por %p81, %p82
      %p84 = scmp.ne.s32.totalorder %s72, %s73
      %p85 = scmp.eq.s32.totalorder %s21, 1
      %p86 = por %p84, %p85
      %p88 = scmp.ne.s32.totalorder %s73, %s87
      %p89 = scmp.eq.s32.totalorder %s21, 0
      %p90 = por %p88, %p89
      %s91 = ssub.s32 %s15, %s22
      %p92 = scmp.eq.s32.totalorder %s91, 0
      %s94 = sadd.s32 %s93, 1
      %s95 = scalar_select %p92, %s93, %s94
      %p98 = pneg %p92
      %p99 = scmp.eq.s32.totalorder %s15, 1
      %p100 = por %p98, %p99
      %p101 = scmp.ne.s32.totalorder %s93, %s96
      %p102 = scmp.eq.s32.totalorder %s15, 0
      %p103 = por %p101, %p102
      %p104 = scmp.ne.s32.totalorder %s93, %s96
      %p105 = scmp.eq.s32.totalorder %s20, 1
      %p106 = por %p104, %p105
      %p107 = scmp.ne.s32.totalorder %s96, %s97
      %p108 = scmp.eq.s32.totalorder %s20, 0
      %p109 = por %p107, %p108
      %p110 = scmp.ne.s32.totalorder %s96, %s97
      %p111 = scmp.eq.s32.totalorder %s21, 1
      %p112 = por %p110, %p111
      %p114 = scmp.ne.s32.totalorder %s97, %s113
      %p115 = scmp.eq.s32.totalorder %s21, 0
      %p116 = por %p114, %p115
      %p117 = scmp.le.s32.totalorder 1, %s15
      %p118 = scmp.lt.s32.totalorder %s15, 3
      %p119 = pnand %p117, %p118
      %p120 = pneg %p119
      // Predicated region
      $region9: #{tpu_custom_call.1} parent=5 // pred_check
        _
      $region10: #{tpu_custom_call.1} parent=5 // pred_check_branch
        %122 = sbr.rel (%p119) target = $region12
      $region11: #{tpu_custom_call.1} parent=5 // pred_region
        %s123 = ssub.s32 %s15, 1
        // Predicated region
        $region13: #{tpu_custom_call.1} parent=11 // pred_check
          %p124 = pneg %p62
        $region14: #{tpu_custom_call.1} parent=11 // pred_check_branch
          %126 = sbr.rel (%p124) target = $region16
        $region15: #{tpu_custom_call.1} parent=11 // pred_region
          _
        $region16: #{tpu_custom_call.1} parent=11 // pred_fallthru
          _
        // Predicated region
        $region17: #{tpu_custom_call.1} parent=11 // pred_check
          %p127 = pneg %p83
        $region18: #{tpu_custom_call.1} parent=11 // pred_check_branch
          %129 = sbr.rel (%p127) target = $region20
        $region19: #{tpu_custom_call.1} parent=11 // pred_region
          _
        $region20: #{tpu_custom_call.1} parent=11 // pred_fallthru
          _
      $region12: #{tpu_custom_call.1} parent=5 // pred_fallthru
        _
      %p130 = scmp.lt.s32.totalorder %s15, 2
      // Predicated region
      $region21: #{tpu_custom_call.1} parent=5 // pred_check
        %p131 = pneg %p130
      $region22: #{tpu_custom_call.1} parent=5 // pred_check_branch
        %133 = sbr.rel (%p131) target = $region24
      $region23: #{tpu_custom_call.1} parent=5 // pred_region
        // Predicated region
        $region25: #{tpu_custom_call.1} parent=23 // pred_check
          %p134 = pneg %p35
        $region26: #{tpu_custom_call.1} parent=23 // pred_check_branch
          %136 = sbr.rel (%p134) target = $region28
        $region27: #{tpu_custom_call.1} parent=23 // pred_region
          %s137 = sand.u32 %s25, 1
          %s138 = scalar_lea.sflag [#allocation3], %s137
          %s139 = sand.u32 %s25, 1
          %s140 = smul.addr %s139, 128
          %s141 = scalar_lea.vmem [#allocation2], %s140
          %s143 = ssub.s32 2048, 2048
          %144 = vsyncadd %s138, %s143
          %s145 = smul.addr %s15, 16
          %s146 = smul.addr %s145, 128
          %s147 = scalar_lea.hbm %s0, %s146
          %s148 = sshll.u32 %s141, 4
          %s149 = int_to_ptr.vmem [resolvable:$true] %s148
          %154 = dma.hbm_to_vmem [thread:$0]  %s147, 2048, %s149, %s138, 256, 256, 16
        $region28: #{tpu_custom_call.1} parent=23 // pred_fallthru
          _
      $region24: #{tpu_custom_call.1} parent=5 // pred_fallthru
        _
      %p155 = scmp.le.s32.totalorder 1, %s15
      %p156 = scmp.lt.s32.totalorder %s15, 3
      %p157 = pnand %p155, %p156
      %p158 = pneg %p157
      // Predicated region
      $region29: #{tpu_custom_call.1} parent=5 // pred_check
        _
      $region30: #{tpu_custom_call.1} parent=5 // pred_check_branch
        %160 = sbr.rel (%p157) target = $region32
      $region31: #{tpu_custom_call.1} parent=5 // pred_region
        %s161 = ssub.s32 %s15, 1
        %s162 = sand.u32 %s28, 1
        %s163 = scalar_lea.sflag [#allocation3], %s162
        %s164 = sand.u32 %s28, 1
        %s165 = smul.addr %s164, 128
        %s166 = scalar_lea.vmem [#allocation2], %s165
        // Predicated region
        $region33: #{tpu_custom_call.1} parent=31 // pred_check
          %p167 = pneg %p41
        $region34: #{tpu_custom_call.1} parent=31 // pred_check_branch
          %169 = sbr.rel (%p167) target = $region36
        $region35: #{tpu_custom_call.1} parent=31 // pred_region
          %170 = dma.done %s163, 2048
        $region36: #{tpu_custom_call.1} parent=31 // pred_fallthru
          _
        %s171 = sand.u32 %s28, 1
        %s172 = scalar_lea.sflag [#allocation3], %s171
        %s173 = sand.u32 %s28, 1
        %s174 = smul.addr %s173, 128
        %s175 = scalar_lea.vmem [#allocation2], %s174
        %p176 = pneg %p41
        %p177 = pneg %p38
        %p178 = pneg %p62
        %p179 = pneg %p59
        %p180 = pneg %p83
        %p181 = pneg %p80
        %p182 = pneg %p109
        %p183 = pneg %p106
        %s184 = sand.u32 %s96, 1
        %s185 = scalar_lea.sflag [#allocation4], %s184
        %s186 = sand.u32 %s96, 1
        %s187 = smul.addr %s186, 128
        %s188 = scalar_lea.vmem [#allocation5], %s187
        %v189 = vld [vmem:[%s1] sm:$0xf]
        %v190 = vld [vmem:[%s2] sm:$0xff]
        %v191 = vld [vmem:[%s2 + $0x8] sm:$0xff]
        %v192 = vld [vmem:[%s2 + $0x10] sm:$0xff]
        %v193 = vld [vmem:[%s2 + $0x18] sm:$0xff]
        %v194 = vld [vmem:[%s2 + $0x20] sm:$0xff]
        %v195 = vld [vmem:[%s2 + $0x28] sm:$0xff]
        %v196 = vld [vmem:[%s2 + $0x30] sm:$0xff]
        %v197 = vld [vmem:[%s2 + $0x38] sm:$0xff]
        %v198 = vld [vmem:[%s166] sm:$0xff]
        %v199 = vld [vmem:[%s166 + $0x8] sm:$0xff]
        %v200 = vld [vmem:[%s166 + $0x10] sm:$0xff]
        %v201 = vld [vmem:[%s166 + $0x18] sm:$0xff]
        %v202 = vld [vmem:[%s166 + $0x20] sm:$0xff]
        %v203 = vld [vmem:[%s166 + $0x28] sm:$0xff]
        %v204 = vld [vmem:[%s166 + $0x30] sm:$0xff]
        %v205 = vld [vmem:[%s166 + $0x38] sm:$0xff]
        %v206 = vld [vmem:[%s166 + $0x40] sm:$0xff]
        %v207 = vld [vmem:[%s166 + $0x48] sm:$0xff]
        %v208 = vld [vmem:[%s166 + $0x50] sm:$0xff]
        %v209 = vld [vmem:[%s166 + $0x58] sm:$0xff]
        %v210 = vld [vmem:[%s166 + $0x60] sm:$0xff]
        %v211 = vld [vmem:[%s166 + $0x68] sm:$0xff]
        %v212 = vld [vmem:[%s166 + $0x70] sm:$0xff]
        %v213 = vld [vmem:[%s166 + $0x78] sm:$0xff]
        %214 = vmatprep.subr.mxu0 0.0
        %215 = vmatpush1.msra.mxu0 1.0
        %216 = vmatprep.subr.mxu0 0.0
        %217 = vmatpush1.msra.mxu0 1.0
        %218 = vmatprep.subr.mxu0 0.0
        %219 = vmatpush1.msra.mxu0 1.0
        %220 = vmatprep.subr.mxu0 0.0
        %221 = vmatpush1.msra.mxu0 1.0
        %222 = vmatprep.subr.mxu0 0.0
        %223 = vmatpush1.msra.mxu0 1.0
        %224 = vmatprep.subr.mxu0 0.0
        %225 = vmatpush1.msra.mxu0 1.0
        %226 = vmatprep.subr.mxu0 0.0
        %227 = vmatpush1.msra.mxu0 1.0
        %228 = vmatprep.subr.mxu0 0.0
        %229 = vmatpush1.msra.mxu0 1.0
        %230 = vmatprep.subr.mxu0 0.0
        %231 = vmatpush1.msra.mxu0 1.0
        %232 = vmatprep.subr.mxu0 0.0
        %233 = vmatpush1.msra.mxu0 1.0
        %234 = vmatprep.subr.mxu0 0.0
        %235 = vmatpush1.msra.mxu0 1.0
        %236 = vmatprep.subr.mxu0 0.0
        %237 = vmatpush1.msra.mxu0 1.0
        %238 = vmatprep.subr.mxu0 0.0
        %239 = vmatpush1.msra.mxu0 1.0
        %240 = vmatprep.subr.mxu0 0.0
        %241 = vmatpush1.msra.mxu0 1.0
        %242 = vmatprep.subr.mxu0 0.0
        %243 = vmatpush1.msra.mxu0 1.0
        %244 = vmatprep.subr.mxu0 0.0
        %245 = vmatpush1.msra.mxu0 1.0
        %246 = vmatprep.subr.mxu0 0.0
        %247 = vmatpush1.msra.mxu0 1.0
        %248 = vmatprep.subr.mxu0 0.0
        %249 = vmatpush1.msra.mxu0 1.0
        %250 = vmatprep.subr.mxu0 0.0
        %251 = vmatpush1.msra.mxu0 1.0
        %252 = vmatprep.subr.mxu0 0.0
        %253 = vmatpush1.msra.mxu0 1.0
        %254 = vmatprep.subr.mxu0 0.0
        %255 = vmatpush1.msra.mxu0 1.0
        %256 = vmatprep.subr.mxu0 0.0
        %257 = vmatpush1.msra.mxu0 1.0
        %258 = vmatprep.subr.mxu0 0.0
        %259 = vmatpush1.msra.mxu0 1.0
        %260 = vmatprep.subr.mxu0 0.0
        %261 = vmatpush1.msra.mxu0 1.0
        %262 = vmatprep.subr.mxu0 0.0
        %263 = vmatpush1.msra.mxu0 1.0
        %264 = vmatprep.subr.mxu0 0.0
        %265 = vmatpush1.msra.mxu0 1.0
        %266 = vmatprep.subr.mxu0 0.0
        %267 = vmatpush1.msra.mxu0 1.0
        %268 = vmatprep.subr.mxu0 0.0
        %269 = vmatpush1.msra.mxu0 1.0
        %270 = vmatprep.subr.mxu0 0.0
        %271 = vmatpush1.msra.mxu0 1.0
        %272 = vmatprep.subr.mxu0 0.0
        %273 = vmatpush1.msra.mxu0 1.0
        %274 = vmatprep.subr.mxu0 0.0
        %275 = vmatpush1.msra.mxu0 1.0
        %276 = vmatprep.subr.mxu0 0.0
        %277 = vmatpush1.msra.mxu0 1.0
        %278 = vmatprep.mubr.f32.mxu0 %v199
        %279 = vmatmul.mubr.f32.gmra.mrb[0].mxu0 %v198
        %v280 = vpop.f32.mrb[0].mxu0
        %v281 = vadd.f32 0.0, %v280
        %v282 = vpop.f32.mrb[0].mxu0
        %283 = vmatprep.mubr.f32.mxu0 %v201
        %284 = vmatmul.mubr.f32.gmra.mrb[0].mxu0 %v200
        %v285 = vpop.f32.mrb[0].mxu0
        %v286 = vadd.f32 0.0, %v285
        %v287 = vpop.f32.mrb[0].mxu0
        %288 = vmatprep.mubr.f32.mxu0 %v203
        %289 = vmatmul.mubr.f32.gmra.mrb[0].mxu0 %v202
        %v290 = vpop.f32.mrb[0].mxu0
        %v291 = vadd.f32 0.0, %v290
        %v292 = vpop.f32.mrb[0].mxu0
        %293 = vmatprep.mubr.f32.mxu0 %v205
        %294 = vmatmul.mubr.f32.gmra.mrb[0].mxu0 %v204
        %v295 = vpop.f32.mrb[0].mxu0
        %v296 = vadd.f32 0.0, %v295
        %v297 = vpop.f32.mrb[0].mxu0
        %298 = vmatprep.mubr.f32.mxu0 %v207
        %299 = vmatmul.mubr.f32.gmra.mrb[0].mxu0 %v206
        %v300 = vpop.f32.mrb[0].mxu0
        %v301 = vadd.f32 0.0, %v300
        %v302 = vpop.f32.mrb[0].mxu0
        %303 = vmatprep.mubr.f32.mxu0 %v209
        %304 = vmatmul.mubr.f32.gmra.mrb[0].mxu0 %v208
        %v305 = vpop.f32.mrb[0].mxu0
        %v306 = vadd.f32 0.0, %v305
        %v307 = vpop.f32.mrb[0].mxu0
        %308 = vmatprep.mubr.f32.mxu0 %v211
        %309 = vmatmul.mubr.f32.gmra.mrb[0].mxu0 %v210
        %v310 = vpop.f32.mrb[0].mxu0
        %v311 = vadd.f32 0.0, %v310
        %v312 = vpop.f32.mrb[0].mxu0
        %313 = vmatprep.mubr.f32.mxu0 %v213
        %314 = vmatmul.mubr.f32.gmra.mrb[0].mxu0 %v212
        %v315 = vpop.f32.mrb[0].mxu0
        %v316 = vadd.f32 0.0, %v315
        %v317 = vpop.f32.mrb[0].mxu0
        %318 = vdwg.mxu0
        %v319 = vmul.f32 %v281, 0.00390625
        %v320 = vmul.f32 %v286, 0.00390625
        %v321 = vmul.f32 %v291, 0.00390625
        %v322 = vmul.f32 %v296, 0.00390625
        %v323 = vmul.f32 %v301, 0.00390625
        %v324 = vmul.f32 %v306, 0.00390625
        %v325 = vmul.f32 %v311, 0.00390625
        %v326 = vmul.f32 %v316, 0.00390625
        %vm327 = vcmask 523264
        %v329 = vsel %vm327, %v189, 0
        %331 = vmatprep.subr.mxu0 0.0
        %332 = vmatpush1.msra.mxu0 %v319
        %333 = vmatprep.subr.mxu0 0.0
        %334 = vmatpush1.msra.mxu0 %v320
        %335 = vmatprep.subr.mxu0 0.0
        %336 = vmatpush1.msra.mxu0 %v321
        %337 = vmatprep.subr.mxu0 0.0
        %338 = vmatpush1.msra.mxu0 %v322
        %339 = vmatprep.subr.mxu0 0.0
        %340 = vmatpush1.msra.mxu0 %v323
        %341 = vmatprep.subr.mxu0 0.0
        %342 = vmatpush1.msra.mxu0 %v324
        %343 = vmatprep.subr.mxu0 0.0
        %344 = vmatpush1.msra.mxu0 %v325
        %345 = vmatprep.subr.mxu0 0.0
        %346 = vmatpush1.msra.mxu0 %v326
        %347 = vmatprep.subr.mxu0 0.0
        %348 = vmatpush1.msra.mxu0 0.0
        %349 = vmatprep.subr.mxu0 0.0
        %350 = vmatpush1.msra.mxu0 0.0
        %351 = vmatprep.subr.mxu0 0.0
        %352 = vmatpush1.msra.mxu0 0.0
        %353 = vmatprep.subr.mxu0 0.0
        %354 = vmatpush1.msra.mxu0 0.0
        %355 = vmatprep.subr.mxu0 0.0
        %356 = vmatpush1.msra.mxu0 0.0
        %357 = vmatprep.subr.mxu0 0.0
        %358 = vmatpush1.msra.mxu0 0.0
        %359 = vmatprep.subr.mxu0 0.0
        %360 = vmatpush1.msra.mxu0 0.0
        %361 = vmatprep.subr.mxu0 0.0
        %362 = vmatpush1.msra.mxu0 0.0
        %363 = vmatprep.subr.mxu0 0.0
        %364 = vmatpush1.msra.mxu0 0.0
        %365 = vmatprep.subr.mxu0 0.0
        %366 = vmatpush1.msra.mxu0 0.0
        %367 = vmatprep.subr.mxu0 0.0
        %368 = vmatpush1.msra.mxu0 0.0
        %369 = vmatprep.subr.mxu0 0.0
        %370 = vmatpush1.msra.mxu0 0.0
        %371 = vmatprep.subr.mxu0 0.0
        %372 = vmatpush1.msra.mxu0 0.0
        %373 = vmatprep.subr.mxu0 0.0
        %374 = vmatpush1.msra.mxu0 0.0
        %375 = vmatprep.subr.mxu0 0.0
        %376 = vmatpush1.msra.mxu0 0.0
        %377 = vmatprep.subr.mxu0 0.0
        %378 = vmatpush1.msra.mxu0 0.0
        %379 = vmatprep.subr.mxu0 0.0
        %380 = vmatpush1.msra.mxu0 0.0
        %381 = vmatprep.subr.mxu0 0.0
        %382 = vmatpush1.msra.mxu0 0.0
        %383 = vmatprep.subr.mxu0 0.0
        %384 = vmatpush1.msra.mxu0 0.0
        %385 = vmatprep.subr.mxu0 0.0
        %386 = vmatpush1.msra.mxu0 0.0
        %387 = vmatprep.subr.mxu0 0.0
        %388 = vmatpush1.msra.mxu0 0.0
        %389 = vmatprep.subr.mxu0 0.0
        %390 = vmatpush1.msra.mxu0 0.0
        %391 = vmatprep.subr.mxu0 0.0
        %392 = vmatpush1.msra.mxu0 0.0
        %393 = vmatprep.subr.mxu0 0.0
        %394 = vmatpush1.msra.mxu0 0.0
        %395 = vmatprep.mubr.f32.mxu0 0.0
        %396 = vmatmul.mubr.f32.gmra.mrb[0].mxu0 %v329
        %v397 = vpop.f32.mrb[0].mxu0
        %v398 = vadd.f32 0.0, %v397
        %v399 = vpop.f32.mrb[0].mxu0
        %400 = vdwg.mxu0
        %v401 = vmax.f32 %v398, 0.0
        %vm402 = vcmask 31744
        %v404 = vsel %vm402, %v190, 0
        %v407 = vsel %vm402, %v191, 0
        %v410 = vsel %vm402, %v192, 0
        %v413 = vsel %vm402, %v193, 0
        %v416 = vsel %vm402, %v194, 0
        %v419 = vsel %vm402, %v195, 0
        %v422 = vsel %vm402, %v196, 0
        %v425 = vsel %vm402, %v197, 0
        %vm427 = vcmask 1043456
        %v429 = vsel %vm427, %v401, 0
        %431 = vmatprep.subr.mxu0 0.0
        %432 = vmatpush1.msra.mxu0 %v429
        %433 = vmatprep.subr.mxu0 0.0
        %434 = vmatpush1.msra.mxu0 0.0
        %435 = vmatprep.subr.mxu0 0.0
        %436 = vmatpush1.msra.mxu0 0.0
        %437 = vmatprep.subr.mxu0 0.0
        %438 = vmatpush1.msra.mxu0 0.0
        %439 = vmatprep.subr.mxu0 0.0
        %440 = vmatpush1.msra.mxu0 0.0
        %441 = vmatprep.subr.mxu0 0.0
        %442 = vmatpush1.msra.mxu0 0.0
        %443 = vmatprep.subr.mxu0 0.0
        %444 = vmatpush1.msra.mxu0 0.0
        %445 = vmatprep.subr.mxu0 0.0
        %446 = vmatpush1.msra.mxu0 0.0
        %447 = vmatprep.subr.mxu0 0.0
        %448 = vmatpush1.msra.mxu0 0.0
        %449 = vmatprep.subr.mxu0 0.0
        %450 = vmatpush1.msra.mxu0 0.0
        %451 = vmatprep.subr.mxu0 0.0
        %452 = vmatpush1.msra.mxu0 0.0
        %453 = vmatprep.subr.mxu0 0.0
        %454 = vmatpush1.msra.mxu0 0.0
        %455 = vmatprep.subr.mxu0 0.0
        %456 = vmatpush1.msra.mxu0 0.0
        %457 = vmatprep.subr.mxu0 0.0
        %458 = vmatpush1.msra.mxu0 0.0
        %459 = vmatprep.subr.mxu0 0.0
        %460 = vmatpush1.msra.mxu0 0.0
        %461 = vmatprep.subr.mxu0 0.0
        %462 = vmatpush1.msra.mxu0 0.0
        %463 = vmatprep.subr.mxu0 0.0
        %464 = vmatpush1.msra.mxu0 0.0
        %465 = vmatprep.subr.mxu0 0.0
        %466 = vmatpush1.msra.mxu0 0.0
        %467 = vmatprep.subr.mxu0 0.0
        %468 = vmatpush1.msra.mxu0 0.0
        %469 = vmatprep.subr.mxu0 0.0
        %470 = vmatpush1.msra.mxu0 0.0
        %471 = vmatprep.subr.mxu0 0.0
        %472 = vmatpush1.msra.mxu0 0.0
        %473 = vmatprep.subr.mxu0 0.0
        %474 = vmatpush1.msra.mxu0 0.0
        %475 = vmatprep.subr.mxu0 0.0
        %476 = vmatpush1.msra.mxu0 0.0
        %477 = vmatprep.subr.mxu0 0.0
        %478 = vmatpush1.msra.mxu0 0.0
        %479 = vmatprep.subr.mxu0 0.0
        %480 = vmatpush1.msra.mxu0 0.0
        %481 = vmatprep.subr.mxu0 0.0
        %482 = vmatpush1.msra.mxu0 0.0
        %483 = vmatprep.subr.mxu0 0.0
        %484 = vmatpush1.msra.mxu0 0.0
        %485 = vmatprep.subr.mxu0 0.0
        %486 = vmatpush1.msra.mxu0 0.0
        %487 = vmatprep.subr.mxu0 0.0
        %488 = vmatpush1.msra.mxu0 0.0
        %489 = vmatprep.subr.mxu0 0.0
        %490 = vmatpush1.msra.mxu0 0.0
        %491 = vmatprep.subr.mxu0 0.0
        %492 = vmatpush1.msra.mxu0 0.0
        %493 = vmatprep.subr.mxu0 0.0
        %494 = vmatpush1.msra.mxu0 0.0
        %495 = vmatprep.mubr.f32.mxu0 0.0
        %496 = vmatmul.mubr.f32.gmra.mrb[0].mxu0 %v404
        %v497 = vpop.f32.mrb[0].mxu0
        %v498 = vadd.f32 0.0, %v497
        %v499 = vpop.f32.mrb[0].mxu0
        %500 = vmatprep.mubr.f32.mxu0 0.0
        %501 = vmatmul.mubr.f32.gmra.mrb[0].mxu0 %v407
        %v502 = vpop.f32.mrb[0].mxu0
        %v503 = vadd.f32 0.0, %v502
        %v504 = vpop.f32.mrb[0].mxu0
        %505 = vmatprep.mubr.f32.mxu0 0.0
        %506 = vmatmul.mubr.f32.gmra.mrb[0].mxu0 %v410
        %v507 = vpop.f32.mrb[0].mxu0
        %v508 = vadd.f32 0.0, %v507
        %v509 = vpop.f32.mrb[0].mxu0
        %510 = vmatprep.mubr.f32.mxu0 0.0
        %511 = vmatmul.mubr.f32.gmra.mrb[0].mxu0 %v413
        %v512 = vpop.f32.mrb[0].mxu0
        %v513 = vadd.f32 0.0, %v512
        %v514 = vpop.f32.mrb[0].mxu0
        %515 = vmatprep.mubr.f32.mxu0 0.0
        %516 = vmatmul.mubr.f32.gmra.mrb[0].mxu0 %v416
        %v517 = vpop.f32.mrb[0].mxu0
        %v518 = vadd.f32 0.0, %v517
        %v519 = vpop.f32.mrb[0].mxu0
        %520 = vmatprep.mubr.f32.mxu0 0.0
        %521 = vmatmul.mubr.f32.gmra.mrb[0].mxu0 %v419
        %v522 = vpop.f32.mrb[0].mxu0
        %v523 = vadd.f32 0.0, %v522
        %v524 = vpop.f32.mrb[0].mxu0
        %525 = vmatprep.mubr.f32.mxu0 0.0
        %526 = vmatmul.mubr.f32.gmra.mrb[0].mxu0 %v422
        %v527 = vpop.f32.mrb[0].mxu0
        %v528 = vadd.f32 0.0, %v527
        %v529 = vpop.f32.mrb[0].mxu0
        %530 = vmatprep.mubr.f32.mxu0 0.0
        %531 = vmatmul.mubr.f32.gmra.mrb[0].mxu0 %v425
        %v532 = vpop.f32.mrb[0].mxu0
        %v533 = vadd.f32 0.0, %v532
        %v534 = vpop.f32.mrb[0].mxu0
        %535 = vdwg.mxu0
        %v536 = vxor.u32 %v498, 2147483648
        %v537 = vxor.u32 %v503, 2147483648
        %v538 = vxor.u32 %v508, 2147483648
        %v539 = vxor.u32 %v513, 2147483648
        %v540 = vxor.u32 %v518, 2147483648
        %v541 = vxor.u32 %v523, 2147483648
        %v542 = vxor.u32 %v528, 2147483648
        %v543 = vxor.u32 %v533, 2147483648
        %v544 = vmul.f32 %v536, 1.442695
        %v545 = vpow.pop %v544
        %v546 = vmul.f32 %v537, 1.442695
        %v547 = vpow.pop %v546
        %v548 = vmul.f32 %v538, 1.442695
        %v549 = vpow.pop %v548
        %v550 = vmul.f32 %v539, 1.442695
        %v551 = vpow.pop %v550
        %v552 = vmul.f32 %v540, 1.442695
        %v553 = vpow.pop %v552
        %v554 = vmul.f32 %v541, 1.442695
        %v555 = vpow.pop %v554
        %v556 = vmul.f32 %v542, 1.442695
        %v557 = vpow.pop %v556
        %v558 = vmul.f32 %v543, 1.442695
        %v559 = vpow.pop %v558
        %v560 = vadd.f32 %v545, 1.0
        %v561 = vadd.f32 %v547, 1.0
        %v562 = vadd.f32 %v549, 1.0
        %v563 = vadd.f32 %v551, 1.0
        %v564 = vadd.f32 %v553, 1.0
        %v565 = vadd.f32 %v555, 1.0
        %v566 = vadd.f32 %v557, 1.0
        %v567 = vadd.f32 %v559, 1.0
        %v568 = vrcp.pop %v560
        %v569 = vmul.f32 1.0, %v568
        %v570 = vrcp.pop %v561
        %v571 = vmul.f32 1.0, %v570
        %v572 = vrcp.pop %v562
        %v573 = vmul.f32 1.0, %v572
        %v574 = vrcp.pop %v563
        %v575 = vmul.f32 1.0, %v574
        %v576 = vrcp.pop %v564
        %v577 = vmul.f32 1.0, %v576
        %v578 = vrcp.pop %v565
        %v579 = vmul.f32 1.0, %v578
        %v580 = vrcp.pop %v566
        %v581 = vmul.f32 1.0, %v580
        %v582 = vrcp.pop %v567
        %v583 = vmul.f32 1.0, %v582
        %585 = vset.pattern.permute.xlu0 0
        %586 = vperm.xlu0 %585, %v569
        %v587 = vpop.permute.xlu0 %586
        %590 = vset.pattern.permute.xlu0 0
        %591 = vperm.xlu0 %590, %v571
        %v592 = vpop.permute.xlu0 %591
        %595 = vset.pattern.permute.xlu0 0
        %596 = vperm.xlu0 %595, %v573
        %v597 = vpop.permute.xlu0 %596
        %600 = vset.pattern.permute.xlu0 0
        %601 = vperm.xlu0 %600, %v575
        %v602 = vpop.permute.xlu0 %601
        %605 = vset.pattern.permute.xlu0 0
        %606 = vperm.xlu0 %605, %v577
        %v607 = vpop.permute.xlu0 %606
        %610 = vset.pattern.permute.xlu0 0
        %611 = vperm.xlu0 %610, %v579
        %v612 = vpop.permute.xlu0 %611
        %615 = vset.pattern.permute.xlu0 0
        %616 = vperm.xlu0 %615, %v581
        %v617 = vpop.permute.xlu0 %616
        %620 = vset.pattern.permute.xlu0 0
        %621 = vperm.xlu0 %620, %v583
        %v622 = vpop.permute.xlu0 %621
        %v624 = vmul.f32 %v198, %v587
        %v625 = vmul.f32 %v199, %v587
        %v626 = vmul.f32 %v200, %v592
        %v627 = vmul.f32 %v201, %v592
        %v628 = vmul.f32 %v202, %v597
        %v629 = vmul.f32 %v203, %v597
        %v630 = vmul.f32 %v204, %v602
        %v631 = vmul.f32 %v205, %v602
        %v632 = vmul.f32 %v206, %v607
        %v633 = vmul.f32 %v207, %v607
        %v634 = vmul.f32 %v208, %v612
        %v635 = vmul.f32 %v209, %v612
        %v636 = vmul.f32 %v210, %v617
        %v637 = vmul.f32 %v211, %v617
        %v638 = vmul.f32 %v212, %v622
        %v639 = vmul.f32 %v213, %v622
        %640 = vst [vmem:[%s188] sm:$0xff] %v624
        %641 = vst [vmem:[%s188 + $0x8] sm:$0xff] %v625
        %642 = vst [vmem:[%s188 + $0x10] sm:$0xff] %v626
        %643 = vst [vmem:[%s188 + $0x18] sm:$0xff] %v627
        %644 = vst [vmem:[%s188 + $0x20] sm:$0xff] %v628
        %645 = vst [vmem:[%s188 + $0x28] sm:$0xff] %v629
        %646 = vst [vmem:[%s188 + $0x30] sm:$0xff] %v630
        %647 = vst [vmem:[%s188 + $0x38] sm:$0xff] %v631
        %648 = vst [vmem:[%s188 + $0x40] sm:$0xff] %v632
        %649 = vst [vmem:[%s188 + $0x48] sm:$0xff] %v633
        %650 = vst [vmem:[%s188 + $0x50] sm:$0xff] %v634
        %651 = vst [vmem:[%s188 + $0x58] sm:$0xff] %v635
        %652 = vst [vmem:[%s188 + $0x60] sm:$0xff] %v636
        %653 = vst [vmem:[%s188 + $0x68] sm:$0xff] %v637
        %654 = vst [vmem:[%s188 + $0x70] sm:$0xff] %v638
        %655 = vst [vmem:[%s188 + $0x78] sm:$0xff] %v639
        %s656 = sand.u32 %s96, 1
        %s657 = scalar_lea.sflag [#allocation4], %s656
        %s658 = sand.u32 %s96, 1
        %s659 = smul.addr %s658, 128
        %s660 = scalar_lea.vmem [#allocation5], %s659
        // Predicated region
        $region37: #{tpu_custom_call.1} parent=31 // pred_check
          %p661 = pneg %p106
        $region38: #{tpu_custom_call.1} parent=31 // pred_check_branch
          %663 = sbr.rel (%p661) target = $region40
        $region39: #{tpu_custom_call.1} parent=31 // pred_region
          %s665 = ssub.s32 2048, 2048
          %666 = vsyncadd %s657, %s665
          %s667 = smul.addr %s20, 16
          %s668 = smul.addr %s667, 128
          %s669 = scalar_lea.hbm %s3, %s668
          %s670 = sshll.u32 %s660, 4
          %s671 = int_to_ptr.vmem [resolvable:$true] %s670
          %676 = dma.vmem_to_hbm [thread:$0]  %s671, 2048, %s669, %s657, 256, 256, 16
        $region40: #{tpu_custom_call.1} parent=31 // pred_fallthru
          _
      $region32: #{tpu_custom_call.1} parent=5 // pred_fallthru
        _
      %p677 = scmp.le.s32.totalorder 2, %s15
      // Predicated region
      $region41: #{tpu_custom_call.1} parent=5 // pred_check
        %p678 = pneg %p677
      $region42: #{tpu_custom_call.1} parent=5 // pred_check_branch
        %680 = sbr.rel (%p678) target = $region44
      $region43: #{tpu_custom_call.1} parent=5 // pred_region
        %s681 = ssub.s32 %s15, 2
        // Predicated region
        $region45: #{tpu_custom_call.1} parent=43 // pred_check
          %p682 = pneg %p112
        $region46: #{tpu_custom_call.1} parent=43 // pred_check_branch
          %684 = sbr.rel (%p682) target = $region48
        $region47: #{tpu_custom_call.1} parent=43 // pred_region
          %s685 = sand.u32 %s97, 1
          %s686 = scalar_lea.sflag [#allocation4], %s685
          %s687 = sand.u32 %s97, 1
          %s688 = smul.addr %s687, 128
          %s689 = scalar_lea.vmem [#allocation5], %s688
          %690 = dma.done %s686, 2048
        $region48: #{tpu_custom_call.1} parent=43 // pred_fallthru
          _
      $region44: #{tpu_custom_call.1} parent=5 // pred_fallthru
        _
    $region6: #{tpu_custom_call.1} parent=1 // loop_footer
      %s19 = sadd.s32 1, %s15
    $region7: #{tpu_custom_call.1} parent=1 // loop_footer_branch
      %14 = sbr.rel target = $region3
    $region8: #{tpu_custom_call.1} parent=1 // loop_exit
      _
    %691 = vsyncpa [#allocation3], 1
    %s692 = scalar_lea.sflag [#allocation3], 1
    %693 = vsyncpa %s692, 1
    %694 = vsyncpa [#allocation4], 1
    %s695 = scalar_lea.sflag [#allocation4], 1
    %696 = vsyncpa %s695, 1

</llo_original>
